<compile_context>
chip_gen: v6e
topology: v6e:2x2x1
jax: 0.10.0
libtpu: 0.0.40
codegen_flags: <defaults>
</compile_context>

<pallas_src>
import jax
import jax.numpy as jnp
from jax import lax
from jax.experimental import pallas as pl
from jax.experimental.pallas import tpu as pltpu


def _make_fused_kernel(n):
    """seed (SMEM) + frames (HBM) -> idx (SMEM) + frame (HBM, via one DMA)."""

    def kernel(seed_ref, frames_hbm, idx_ref, frame_hbm, sem):
        # lowbias32-style integer mix of the seed, entirely on the scalar path.
        # All constants fit in int32, shifts are logical, multiplies wrap.
        x = seed_ref[0] + jnp.int32(0x7ED55D16)
        x = (x ^ lax.shift_right_logical(x, jnp.int32(16))) * jnp.int32(0x045D9F3B)
        x = (x ^ lax.shift_right_logical(x, jnp.int32(16))) * jnp.int32(0x045D9F3B)
        x = x ^ lax.shift_right_logical(x, jnp.int32(16))
        # Uniform index in [0, n): mask to non-negative, then modulo.
        idx = (x & jnp.int32(0x7FFFFFFF)) % jnp.int32(n)
        idx_ref[0] = idx

        # Single HBM->HBM DMA of the selected contiguous row; the rest of the
        # bank never moves.  No VMEM staging, no masked partial stores, no
        # extra barriers -- the copy's wait() is the only sync needed.
        cp = pltpu.make_async_copy(frames_hbm.at[pl.ds(idx, 1)], frame_hbm, sem)
        cp.start()
        cp.wait()

    return kernel


def random_texture_forward(current_emb, frames, seed):
    """Pallas equivalent of RandomTexture.forward(current_emb, frames).

    current_emb is unused (as in the reference).  Returns (index, frame).
    """
    del current_emb  # unused by the reference forward
    n, c, h, w = frames.shape
    chw = c * h * w
    # Flat (N, C*H*W) view: the selected row is one contiguous stripe, so the
    # gather is a single dense DMA regardless of frame size or dtype.
    frames_flat = frames.reshape(n, chw)
    seed_arr = jnp.asarray([seed], dtype=jnp.int32)

    idx, frame = pl.pallas_call(
        _make_fused_kernel(n),
        out_shape=(
            jax.ShapeDtypeStruct((1,), jnp.int32),
            jax.ShapeDtypeStruct((1, chw), frames.dtype),
        ),
        in_specs=[
            pl.BlockSpec(memory_space=pltpu.MemorySpace.SMEM),  # seed
            pl.BlockSpec(memory_space=pl.ANY),                  # frames (HBM)
        ],
        out_specs=(
            pl.BlockSpec(memory_space=pltpu.MemorySpace.SMEM),  # idx
            pl.BlockSpec(memory_space=pl.ANY),                  # frame (HBM)
        ),
        scratch_shapes=[pltpu.SemaphoreType.DMA(())],
    )(seed_arr, frames_flat)

    return idx[0], frame.reshape(c, h, w)


if __name__ == "__main__":
    key = jax.random.PRNGKey(0)
    k_emb, k_frames = jax.random.split(key)

    # Small shapes consistent with the module's forward signature:
    # a batch of current embeddings and a bank of candidate frames (NCHW).
    current_emb = jax.random.normal(k_emb, (2, 32), dtype=jnp.float32)
    frames = jax.random.normal(k_frames, (8, 4, 16, 16), dtype=jnp.float32)

    idx, frame = random_texture_forward(current_emb, frames, seed=0)
    idx = jax.block_until_ready(idx)
    frame = jax.block_until_ready(frame)

    i = int(idx)
    assert 0 <= i < frames.shape[0], f"index out of range: {i}"
    assert jnp.allclose(frame, frames[i]), "gathered frame mismatch"

    print("KERNEL_OK")
</pallas_src>

<mosaic_0001>
module attributes {stable_mosaic.version = 11 : i64} {
  func.func @kernel(%arg0: memref<1xi32, #tpu.memory_space<smem>>, %arg1: memref<8x1024xf32, #tpu.memory_space<any>>, %arg2: memref<1xi32, #tpu.memory_space<smem>>, %arg3: memref<1x1024xf32, #tpu.memory_space<any>>, %arg4: memref<!tpu.dma_semaphore, #tpu.memory_space<semaphore_mem>>) attributes {dimension_semantics = [], scalar_prefetch = 0 : i64, scratch_operands = 1 : i64, tpu.core_type = #tpu.core_type<tc>} {
    %c0 = arith.constant 0 : index
    %0 = memref.load %arg0[%c0] : memref<1xi32, #tpu.memory_space<smem>>
    %c2127912214_i32 = arith.constant 2127912214 : i32
    %1 = arith.addi %0, %c2127912214_i32 : i32
    %c16_i32 = arith.constant 16 : i32
    %2 = arith.shrui %1, %c16_i32 : i32
    %3 = arith.xori %1, %2 : i32
    %c73244475_i32 = arith.constant 73244475 : i32
    %4 = arith.muli %3, %c73244475_i32 : i32
    %c16_i32_0 = arith.constant 16 : i32
    %5 = arith.shrui %4, %c16_i32_0 : i32
    %6 = arith.xori %4, %5 : i32
    %c73244475_i32_1 = arith.constant 73244475 : i32
    %7 = arith.muli %6, %c73244475_i32_1 : i32
    %c16_i32_2 = arith.constant 16 : i32
    %8 = arith.shrui %7, %c16_i32_2 : i32
    %9 = arith.xori %7, %8 : i32
    %c2147483647_i32 = arith.constant 2147483647 : i32
    %10 = arith.andi %9, %c2147483647_i32 : i32
    %c8_i32 = arith.constant 8 : i32
    %c0_i32 = arith.constant 0 : i32
    %11 = arith.cmpi eq, %c8_i32, %c0_i32 : i32
    %c1_i32 = arith.constant 1 : i32
    %12 = arith.select %11, %c1_i32, %c8_i32 : i32
    %13 = arith.remsi %10, %12 : i32
    %c0_i32_3 = arith.constant 0 : i32
    %14 = arith.cmpi ne, %13, %c0_i32_3 : i32
    %c0_i32_4 = arith.constant 0 : i32
    %15 = arith.cmpi slt, %13, %c0_i32_4 : i32
    %c0_i32_5 = arith.constant 0 : i32
    %16 = arith.cmpi slt, %12, %c0_i32_5 : i32
    %17 = arith.xori %15, %16 : i1
    %18 = arith.andi %17, %14 : i1
    %19 = arith.addi %13, %12 : i32
    %20 = arith.select %18, %19, %13 : i32
    %c0_6 = arith.constant 0 : index
    %21 = memref.load %arg2[%c0_6] : memref<1xi32, #tpu.memory_space<smem>>
    memref.store %20, %arg2[%c0_6] : memref<1xi32, #tpu.memory_space<smem>>
    %c0_i32_7 = arith.constant 0 : i32
    %22 = tpu.memref_slice %arg1[%20, %c0_i32_7] : memref<8x1024xf32, #tpu.memory_space<any>> -> memref<1x1024xf32, #tpu.memory_space<any>>
    tpu.enqueue_dma source(%22 : memref<1x1024xf32, #tpu.memory_space<any>>) target(%arg3 : memref<1x1024xf32, #tpu.memory_space<any>>) target_semaphore(%arg4 : memref<!tpu.dma_semaphore, #tpu.memory_space<semaphore_mem>>)
    %c0_i32_8 = arith.constant 0 : i32
    %23 = tpu.memref_slice %arg1[%20, %c0_i32_8] : memref<8x1024xf32, #tpu.memory_space<any>> -> memref<1x1024xf32, #tpu.memory_space<any>>
    tpu.wait_dma2 semaphore(%arg4 : memref<!tpu.dma_semaphore, #tpu.memory_space<semaphore_mem>>) src(%23 : memref<1x1024xf32, #tpu.memory_space<any>>) dst(%arg3 : memref<1x1024xf32, #tpu.memory_space<any>>)
    return
  }
}

</mosaic_0001>

<llo_original>
// kernel: tpu_custom_call.1
$region0: #{tpu_custom_call.1}
  #allocation0 [shape = 'u32[]', space=smem, size = 0x4, offset = 0x4, fixed_abs, tag = 'smem constant byte address 0x4 - core index']
  #allocation1 [shape = 'u32[144,128]{1,0:T(1,128)}', space=vmem, size = 0x12000, scoped, tag = 'internal scratch']
  #allocation2 [shape = 's32[1]{0}', space=sflag, size = 0x4, scoped, tag = 'scratch operand']
  #allocation3 [shape = 's32[1]{0:T(128)S(6)}', space=smem, size = 0x200, scoped, tag = 'scoped memory for tpu_custom_call.1']
  #allocation6 [shape = 's32[]', space=sflag, size = 0x4, offset = 0, fixed_abs, tag = 'sflag constant byte address 0x0 - dummy sync flag']
  %s0 = inlined_call_operand.<no memory space> [shape: s32[1], index: 0, kind: input, shape index: {}]
  %s1 = inlined_call_operand.hbm [shape: f32[8,1024], index: 1, kind: input, shape index: {}]
  %s2 = inlined_call_operand.hbm [shape: s32[1], index: 2, kind: output, shape index: {0}]
  %s3 = inlined_call_operand.hbm [shape: f32[1,1024], index: 3, kind: output, shape index: {1}]
  %4 = xla_tuple %s2, %s3
  %s5 = sld [smem:[#allocation0]]
  $region14: #{tpu_custom_call.1} parent=0
    _
  %s7 = ssub.s32 1, %s5
  %s8 = scalar_select 0, %s7, %s5
  %9 = sst [smem:[#allocation3]] %s0
  $region1: #{tpu_custom_call.1} parent=0
    #allocation4 [shape = 'u8[512]{0}', space=smem, size = 0x200, scoped, tag = 'output window, operand 0, single buffered']
    #allocation5 [shape = 's32[1]{0}', space=sflag, size = 0x4, scoped, tag = 'scoped memory for tpu_custom_call.1']
    #allocation7 [shape = 'u32[3]{0}', space=smem, size = 0xc, scoped, tag = 'DMA stride descriptor']
    %10 = vsyncpa [#allocation5], 0
    // Predicated region
    $region2: #{tpu_custom_call.1} parent=1 // pred_check
      _
    $region3: #{tpu_custom_call.1} parent=1 // pred_check_branch
      %12 = sbr.rel (0) target = $region5
    $region4: #{tpu_custom_call.1} parent=1 // pred_region
      _
    $region5: #{tpu_custom_call.1} parent=1 // pred_fallthru
      _
    %s13 = sld [smem:[#allocation3]]
    %s14 = sadd.s32 %s13, 2127912214
    %s15 = sshrl.u32 %s14, 16
    %s16 = sxor.u32 %s14, %s15
    %s17 = smul.u32 %s16, 73244475
    %s18 = sshrl.u32 %s17, 16
    %s19 = sxor.u32 %s17, %s18
    %s20 = smul.u32 %s19, 73244475
    %s21 = sshrl.u32 %s20, 16
    %s22 = sxor.u32 %s20, %s21
    %s23 = sand.u32 %s22, 2147483647
    %p24 = scmp.lt.s32.totalorder %s23, 0
    %s25 = ssub.s32 0, %s23
    %s26 = scalar_select %p24, %s25, %s23
    %s27 = sand.u32 %s26, 7
    %s28 = ssub.s32 0, %s27
    %s29 = scalar_select %p24, %s28, %s27
    %p30 = scmp.ne.s32.totalorder %s29, 0
    %p31 = scmp.lt.s32.totalorder %s29, 0
    %p32 = pnand %p31, %p30
    %p33 = pneg %p32
    %s34 = sadd.s32 %s29, 8
    %s35 = scalar_select %p33, %s34, %s29
    %s36 = scalar_lea.smem [#allocation4], 0
    %37 = sst [smem:[%s36]] %s35
    %s38 = sshrl.u32 %s35, 3
    %s39 = sand.u32 %s35, 7
    %s40 = smul.u32 %s38, 64
    %s41 = sadd.s32 %s39, %s40
    %s42 = smul.addr %s41, 16
    %s43 = scalar_lea.hbm %s1, %s42
    %s45 = sshll.u32 1, 14
    %s46 = sxor.u32 4294967295, %s45
    %50 = sst [smem:[#allocation7]] 128
    %s51 = scalar_lea.smem [#allocation7], 1
    %52 = sst [smem:[%s51]] 16
    %s53 = scalar_lea.smem [#allocation7], 2
    %54 = sst [smem:[%s53]] 1
    %56 = dma.general %s43, 128, %s3, [#allocation2], 131072, [#allocation7], 0, 0
    %s57 = smul.u32 1, 8
    %s58 = sshll.u32 %s57, 4
    %59 = dma.done [#allocation2], %s58
    // Predicated region
    $region6: #{tpu_custom_call.1} parent=1 // pred_check
      _
    $region7: #{tpu_custom_call.1} parent=1 // pred_check_branch
      %61 = sbr.rel (0) target = $region9
    $region8: #{tpu_custom_call.1} parent=1 // pred_region
      %s63 = ssub.s32 16, 16
      %64 = vsyncadd [#allocation5], %s63
      %67 = dma.smem_to_hbm [#allocation4], 16, %s2, [#allocation5]
    $region9: #{tpu_custom_call.1} parent=1 // pred_fallthru
      _
    // Predicated region
    $region10: #{tpu_custom_call.1} parent=1 // pred_check
      _
    $region11: #{tpu_custom_call.1} parent=1 // pred_check_branch
      %69 = sbr.rel (0) target = $region13
    $region12: #{tpu_custom_call.1} parent=1 // pred_region
      %70 = dma.done [#allocation5], 16
    $region13: #{tpu_custom_call.1} parent=1 // pred_fallthru
      _
    %71 = sfence
    %72 = vsyncpa [#allocation5], 1
  %73 = vsyncmov [#allocation2]
  %s74 = vpop.sfrf %73
  %p75 = scmp.eq.s32.totalorder %s74, 0
  %p76 = pneg %p75
  %78 = shalt.err (%p76)

</llo_original>
